<compile_context>
chip_gen: v7x
topology: tpu7x:2x2x1
jax: 0.10.0
libtpu: 0.0.40
codegen_flags: <defaults>
</compile_context>

<pallas_src>
import jax
import jax.numpy as jnp
from jax.experimental import pallas as pl
from jax.experimental.pallas import tpu as pltpu


def transform_kernel(x_ref, w_ref, bm_ref, out_ref):
    """One grid step over BN batch elements.

    x_ref  : (BN, k, d)   region-feature tile (f32)
    w_ref  : (d, k*k)     conv weight (bf16), column c = i*k+j  <->  W[i, j, :]
    bm_ref : (k, k*k)     f32 bias where column belongs to group i, -1e30 elsewhere
    out_ref: (BN, k, d)   transformed features
    """
    bn, k, d = x_ref.shape
    kk = k * k

    x = x_ref[...]                                            # (BN, k, d) f32

    # (BN, k, d) -> (BN*k, d) is tile-aligned in f32 (one padded vreg per
    # batch), so this reshape is free; cast to bf16 right at the MXU operand.
    x2 = x.reshape(bn * k, d).astype(jnp.bfloat16)

    # Grouped Conv1d(k, k*k, d, groups=k) as a single bf16 MXU matmul with f32
    # accumulation (M = BN*k).
    scores = jnp.dot(x2, w_ref[...], preferred_element_type=jnp.float32)  # (BN*k, kk)
    scores = scores.reshape(bn, k, kk) + bm_ref[...][None]    # + bias / -1e30 mask

    # Unnormalized, numerically-stable softmax numerators (f32).  Masked lanes
    # give exp(-1e30 - m) == 0.0 exactly, so off-group columns vanish.
    m = jnp.max(scores, axis=-1, keepdims=True)
    e = jnp.exp(scores - m)                                   # (BN, k, kk) f32
    denom = jnp.sum(e, axis=-1, keepdims=True)                # (BN, k, 1)  f32

    # Reassociated mix: (e @ G) @ x == e @ (G @ x) == e @ x_rep, where
    # x_rep[b, c, :] = x[b, c % k, :].  8-sublane-aligned f32 concat, cast to
    # bf16 for the MXU.
    x_rep = jnp.concatenate([x] * k, axis=1).astype(jnp.bfloat16)   # (BN, kk, d)
    mix = jnp.einsum('bic,bcd->bid', e.astype(jnp.bfloat16), x_rep,
                     preferred_element_type=jnp.float32)            # (BN, k, d)

    # Normalize after the mix (d lanes instead of k*k); approx reciprocal goes
    # to the EUP slot.
    out = mix * pl.reciprocal(denom, approx=True)
    out_ref[...] = out.astype(out_ref.dtype)


def _choose_block_n(n, cap=256):
    """Batch-block size.

    Large blocks amortize the ~0.35us per-grid-step overhead; the cap keeps
    the padded f32 working set (double-buffered I/O windows plus in-kernel
    temporaries, dominated by the (BN, k*k, d) x_rep tile) comfortably within
    VMEM on every generation, including v7x's 64 MiB physical VMEM.  When the
    whole problem fits in one block but is reasonably large, split it in two
    so dimension_semantics=("parallel",) can span both v7x TensorCores.
    """
    if n <= cap:
        if n >= 256:
            return -(-n // 2)
        return n
    return cap


def transform_forward(region_feats, conv_w, conv_b, block_n=None):
    """region_feats: (N, k, d); conv_w: (k*k, d) [Conv1d weight squeezed]; conv_b: (k*k,)."""
    N, k, d = region_feats.shape
    kk = k * k
    assert conv_w.shape == (kk, d) and conv_b.shape == (kk,)

    if block_n is None:
        block_n = _choose_block_n(N)
    grid_n = -(-N // block_n)                 # cdiv
    n_pad = grid_n * block_n

    x = region_feats
    if n_pad != N:                            # ragged tail: pad, slice after the call
        x = jnp.pad(x, ((0, n_pad - N), (0, 0), (0, 0)))

    # Pre-arranged, grid-invariant operands (no in-kernel transposes).
    w_all = conv_w.T.astype(jnp.bfloat16)                      # (d, kk) bf16 MXU operand
    ids = jnp.arange(kk)
    owner = ids // k                                           # group that owns column c
    bias_mask = jnp.where(owner[None, :] == jnp.arange(k)[:, None],
                          conv_b[None, :].astype(jnp.float32),
                          jnp.float32(-1e30))                  # (k, kk) f32

    out = pl.pallas_call(
        transform_kernel,
        out_shape=jax.ShapeDtypeStruct((n_pad, k, d), region_feats.dtype),
        grid_spec=pltpu.PrefetchScalarGridSpec(
            num_scalar_prefetch=0,
            grid=(grid_n,),
            in_specs=[
                pl.BlockSpec((block_n, k, d), lambda n: (n, 0, 0)),
                pl.BlockSpec((d, kk), lambda n: (0, 0)),
                pl.BlockSpec((k, kk), lambda n: (0, 0)),
            ],
            out_specs=pl.BlockSpec((block_n, k, d), lambda n: (n, 0, 0)),
        ),
        compiler_params=pltpu.CompilerParams(
            dimension_semantics=("parallel",),
            vmem_limit_bytes=64 * 1024 * 1024),
    )(x, w_all, bias_mask)

    return out[:N] if n_pad != N else out


def transform_reference(region_feats, conv_w, conv_b):
    """Plain-JAX reference matching the PyTorch forward exactly (f32)."""
    N, k, d = region_feats.shape
    w = conv_w.reshape(k, k, d)          # W[i, j, :] = conv weight of out-channel i*k+j
    b = conv_b.reshape(k, k)
    mult = jnp.einsum('nid,ijd->nij', region_feats, w, precision='highest') + b[None]
    mult = jax.nn.softmax(mult, axis=-1)
    return jnp.einsum('nij,njd->nid', mult, region_feats, precision='highest')


if __name__ == "__main__":
    key = jax.random.PRNGKey(0)
    N, k, d = 16, 8, 32

    k1, k2, k3 = jax.random.split(key, 3)
    region_feats = jax.random.normal(k1, (N, k, d), dtype=jnp.float32)
    # nn.Conv1d(k, k*k, d, groups=k) init bounds: fan_in = (in/groups) * kernel = d
    bound = 1.0 / jnp.sqrt(d)
    conv_w = jax.random.uniform(k2, (k * k, d), dtype=jnp.float32,
                                minval=-bound, maxval=bound)
    conv_b = jax.random.uniform(k3, (k * k,), dtype=jnp.float32,
                                minval=-bound, maxval=bound)

    out = transform_forward(region_feats, conv_w, conv_b)
    out = jax.block_until_ready(out)

    ref = transform_reference(region_feats, conv_w, conv_b)
    assert out.shape == (N, k, d)
    # bf16 MXU operands + approx-reciprocal normalization => ~1% relative error
    # vs the pure-f32 reference (intentional precision trade, see perf review).
    assert jnp.allclose(out, ref, atol=5e-2, rtol=5e-2), \
        float(jnp.max(jnp.abs(out - ref)))

    print("KERNEL_OK")
</pallas_src>

<mosaic_0001>
module attributes {stable_mosaic.version = 11 : i64} {
  func.func @transform_kernel(%arg0: i32, %arg1: memref<16x8x32xf32, #tpu.memory_space<vmem>>, %arg2: memref<32x64xbf16, #tpu.memory_space<vmem>>, %arg3: memref<8x64xf32, #tpu.memory_space<vmem>>, %arg4: memref<16x8x32xf32, #tpu.memory_space<vmem>>) attributes {dimension_semantics = [#tpu.dimension_semantics<parallel>], iteration_bounds = array<i64: 1>, scalar_prefetch = 0 : i64, scratch_operands = 0 : i64, tpu.core_type = #tpu.core_type<tc>, window_params = [{transform_indices = @transform_0, window_bounds = array<i64: 16, 8, 32>}, {pipeline_mode = #tpu.pipeline_mode<synchronous>, transform_indices = @transform_1, window_bounds = array<i64: 32, 64>}, {pipeline_mode = #tpu.pipeline_mode<synchronous>, transform_indices = @transform_2, window_bounds = array<i64: 8, 64>}, {transform_indices = @transform_3, window_bounds = array<i64: 16, 8, 32>}]} {
    %c0 = arith.constant 0 : index
    %c0_0 = arith.constant 0 : index
    %c0_1 = arith.constant 0 : index
    %0 = vector.load %arg1[%c0, %c0_0, %c0_1] : memref<16x8x32xf32, #tpu.memory_space<vmem>>, vector<16x8x32xf32>
    %1 = vector.shape_cast %0 : vector<16x8x32xf32> to vector<128x32xf32>
    %2 = arith.truncf %1 : vector<128x32xf32> to vector<128x32xbf16>
    %c0_2 = arith.constant 0 : index
    %c0_3 = arith.constant 0 : index
    %3 = vector.load %arg2[%c0_2, %c0_3] : memref<32x64xbf16, #tpu.memory_space<vmem>>, vector<32x64xbf16>
    %cst = arith.constant dense<0.000000e+00> : vector<128x64xf32>
    %4 = tpu.matmul %2, %3, %cst {dimension_numbers = #tpu.dot_dimension_numbers<[1], [0], [0], [1], [0, 0, 1, 1], [], []>} : vector<128x32xbf16>, vector<32x64xbf16>, vector<128x64xf32> -> vector<128x64xf32>
    %5 = vector.shape_cast %4 : vector<128x64xf32> to vector<16x8x64xf32>
    %c0_4 = arith.constant 0 : index
    %c0_5 = arith.constant 0 : index
    %6 = vector.load %arg3[%c0_4, %c0_5] : memref<8x64xf32, #tpu.memory_space<vmem>>, vector<8x64xf32>
    %7 = vector.shape_cast %6 : vector<8x64xf32> to vector<1x8x64xf32>
    %8 = vector.broadcast %7 : vector<1x8x64xf32> to vector<16x8x64xf32>
    %9 = arith.addf %5, %8 : vector<16x8x64xf32>
    %cst_6 = arith.constant dense<0xFF800000> : vector<16x8xf32>
    %10 = vector.multi_reduction <maximumf>, %9, %cst_6 [2] : vector<16x8x64xf32> to vector<16x8xf32>
    %11 = vector.shape_cast %10 : vector<16x8xf32> to vector<16x8x1xf32>
    %12 = vector.broadcast %11 : vector<16x8x1xf32> to vector<16x8x64xf32>
    %13 = arith.subf %9, %12 : vector<16x8x64xf32>
    %14 = math.exp %13 : vector<16x8x64xf32>
    %cst_7 = arith.constant dense<0.000000e+00> : vector<16x8xf32>
    %15 = vector.multi_reduction <add>, %14, %cst_7 [2] : vector<16x8x64xf32> to vector<16x8xf32>
    %16 = vector.shape_cast %15 : vector<16x8xf32> to vector<16x8x1xf32>
    %17 = tpu.concatenate %0, %0, %0, %0, %0, %0, %0, %0 in 1 : vector<16x8x32xf32>, vector<16x8x32xf32>, vector<16x8x32xf32>, vector<16x8x32xf32>, vector<16x8x32xf32>, vector<16x8x32xf32>, vector<16x8x32xf32>, vector<16x8x32xf32> -> vector<16x64x32xf32>
    %18 = arith.truncf %17 : vector<16x64x32xf32> to vector<16x64x32xbf16>
    %19 = arith.truncf %14 : vector<16x8x64xf32> to vector<16x8x64xbf16>
    "tpu.trace_start"() <{level = 10 : i32, message = "bic,bcd->bid"}> : () -> ()
    %cst_8 = arith.constant dense<0.000000e+00> : vector<16x8x32xf32>
    %20 = tpu.matmul %19, %18, %cst_8 {dimension_numbers = #tpu.dot_dimension_numbers<[2], [1], [1], [2], [0, 0, 0, 1, 1, 2], [0], [0]>} : vector<16x8x64xbf16>, vector<16x64x32xbf16>, vector<16x8x32xf32> -> vector<16x8x32xf32>
    "tpu.trace_stop"() : () -> ()
    %21 = tpu.reciprocal %16 {approx = true} : vector<16x8x1xf32> -> vector<16x8x1xf32>
    %22 = vector.broadcast %21 : vector<16x8x1xf32> to vector<16x8x32xf32>
    %23 = arith.mulf %20, %22 : vector<16x8x32xf32>
    %c0_9 = arith.constant 0 : index
    %c0_10 = arith.constant 0 : index
    %c0_11 = arith.constant 0 : index
    %24 = vector.load %arg4[%c0_9, %c0_10, %c0_11] : memref<16x8x32xf32, #tpu.memory_space<vmem>>, vector<16x8x32xf32>
    tpu.vector_store %arg4[%c0_9, %c0_10, %c0_11], %23 {strides = array<i32>} : memref<16x8x32xf32, #tpu.memory_space<vmem>>, vector<16x8x32xf32>,
    return
  }
  func.func @transform_0(%arg0: i32) -> (i32, i32, i32) {
    %c0_i32 = arith.constant 0 : i32
    %c0_i32_0 = arith.constant 0 : i32
    %c0_i32_1 = arith.constant 0 : i32
    return %arg0, %c0_i32, %c0_i32_0 : i32, i32, i32
  }
  func.func @transform_1(%arg0: i32) -> (i32, i32) {
    %c0_i32 = arith.constant 0 : i32
    %c0_i32_0 = arith.constant 0 : i32
    %c0_i32_1 = arith.constant 0 : i32
    return %c0_i32, %c0_i32_0 : i32, i32
  }
  func.func @transform_2(%arg0: i32) -> (i32, i32) {
    %c0_i32 = arith.constant 0 : i32
    %c0_i32_0 = arith.constant 0 : i32
    %c0_i32_1 = arith.constant 0 : i32
    return %c0_i32, %c0_i32_0 : i32, i32
  }
  func.func @transform_3(%arg0: i32) -> (i32, i32, i32) {
    %c0_i32 = arith.constant 0 : i32
    %c0_i32_0 = arith.constant 0 : i32
    %c0_i32_1 = arith.constant 0 : i32
    return %arg0, %c0_i32, %c0_i32_0 : i32, i32, i32
  }
}

</mosaic_0001>

<llo_original>
// kernel: tpu_custom_call.1
$region0: #{tpu_custom_call.1}
  #allocation0 [shape = 'u32[]', space=smem, size = 0x4, offset = 0x4, fixed_abs, tag = 'smem constant byte address 0x4 - core index']
  #allocation1 [shape = 'u32[144,128]{1,0:T(1,128)}', space=vmem, size = 0x12000, scoped, tag = 'internal scratch']
  %s0 = inlined_call_operand.hbm [shape: f32[16,8,32], index: 0, kind: input, shape index: {}]
  %s1 = inlined_call_operand.hbm [shape: bf16[32,64], index: 1, kind: input, shape index: {}]
  %s2 = inlined_call_operand.hbm [shape: f32[8,64], index: 2, kind: input, shape index: {}]
  %s3 = inlined_call_operand.hbm [shape: f32[16,8,32], index: 3, kind: output, shape index: {}]
  %s4 = sld [smem:[#allocation0]]
  $region34: #{tpu_custom_call.1} parent=0
    _
  %s6 = ssub.s32 1, %s4
  %s7 = scalar_select 0, %s6, %s4
  $region1: #{tpu_custom_call.1} parent=0
    #allocation2 [shape = 'u8[65536]{0}', space=vmem, size = 0x10000, scoped, tag = 'input window, operand 0, single buffered']
    #allocation3 [shape = 's32[1]{0}', space=sflag, size = 0x4, scoped, tag = 'scoped memory for tpu_custom_call.1']
    #allocation4 [shape = 's32[1]{0}', space=sflag, size = 0x4, scoped, tag = 'scoped memory for tpu_custom_call.1']
    #allocation5 [shape = 'u8[8192]{0}', space=vmem, size = 0x2000, scoped, tag = 'input window, operand 1, single buffered']
    #allocation6 [shape = 's32[1]{0}', space=sflag, size = 0x4, scoped, tag = 'scoped memory for tpu_custom_call.1']
    #allocation7 [shape = 'u8[4096]{0}', space=vmem, size = 0x1000, scoped, tag = 'input window, operand 2, single buffered']
    #allocation8 [shape = 'u8[65536]{0}', space=vmem, size = 0x10000, scoped, tag = 'output window, operand 0, single buffered']
    %8 = vsyncpa [#allocation3], 0
    %9 = vsyncpa [#allocation6], 0
    %10 = vsyncpa [#allocation4], 0
    // Predicated region
    $region2: #{tpu_custom_call.1} parent=1 // pred_check
      _
    $region3: #{tpu_custom_call.1} parent=1 // pred_check_branch
      %12 = sbr.rel (0) target = $region5
    $region4: #{tpu_custom_call.1} parent=1 // pred_region
      %s14 = ssub.s32 2048, 2048
      %15 = vsyncadd [#allocation3], %s14
      %s16 = sshll.u32 [#allocation2], 4
      %s17 = int_to_ptr.vmem [resolvable:$true] %s16
      %22 = dma.hbm_to_vmem [thread:$0]  %s0, 2048, %s17, [#allocation3], 128, 128, 8
    $region5: #{tpu_custom_call.1} parent=1 // pred_fallthru
      _
    // Predicated region
    $region6: #{tpu_custom_call.1} parent=1 // pred_check
      _
    $region7: #{tpu_custom_call.1} parent=1 // pred_check_branch
      %24 = sbr.rel (0) target = $region9
    $region8: #{tpu_custom_call.1} parent=1 // pred_region
      %s26 = ssub.s32 256, 256
      %27 = vsyncadd [#allocation6], %s26
      %s28 = sshll.u32 [#allocation5], 4
      %s29 = int_to_ptr.vmem [resolvable:$true] %s28
      %34 = dma.hbm_to_vmem [thread:$0]  %s1, 256, %s29, [#allocation6], 64, 64, 4
    $region9: #{tpu_custom_call.1} parent=1 // pred_fallthru
      _
    // Predicated region
    $region10: #{tpu_custom_call.1} parent=1 // pred_check
      _
    $region11: #{tpu_custom_call.1} parent=1 // pred_check_branch
      %36 = sbr.rel (0) target = $region13
    $region12: #{tpu_custom_call.1} parent=1 // pred_region
      %s38 = ssub.s32 128, 128
      %39 = vsyncadd [#allocation6], %s38
      %s41 = sshll.u32 [#allocation7], 4
      %s42 = int_to_ptr.vmem [resolvable:$true] %s41
      %44 = dma.hbm_to_vmem [thread:$0]  %s2, 128, %s42, [#allocation6]
    $region13: #{tpu_custom_call.1} parent=1 // pred_fallthru
      _
    // Predicated region
    $region14: #{tpu_custom_call.1} parent=1 // pred_check
      _
    $region15: #{tpu_custom_call.1} parent=1 // pred_check_branch
      %46 = sbr.rel (0) target = $region17
    $region16: #{tpu_custom_call.1} parent=1 // pred_region
      %47 = dma.done [#allocation3], 2048
    $region17: #{tpu_custom_call.1} parent=1 // pred_fallthru
      _
    // Predicated region
    $region18: #{tpu_custom_call.1} parent=1 // pred_check
      _
    $region19: #{tpu_custom_call.1} parent=1 // pred_check_branch
      %49 = sbr.rel (0) target = $region21
    $region20: #{tpu_custom_call.1} parent=1 // pred_region
      %50 = dma.done [#allocation6], 256
    $region21: #{tpu_custom_call.1} parent=1 // pred_fallthru
      _
    // Predicated region
    $region22: #{tpu_custom_call.1} parent=1 // pred_check
      _
    $region23: #{tpu_custom_call.1} parent=1 // pred_check_branch
      %52 = sbr.rel (0) target = $region25
    $region24: #{tpu_custom_call.1} parent=1 // pred_region
      %53 = dma.done [#allocation6], 128
    $region25: #{tpu_custom_call.1} parent=1 // pred_fallthru
      _
    %v55 = vld [vmem:[#allocation2] sm:$0xff]
    %v56 = vld [vmem:[#allocation2 + $0x8] sm:$0xff]
    %v57 = vld [vmem:[#allocation2 + $0x10] sm:$0xff]
    %v58 = vld [vmem:[#allocation2 + $0x18] sm:$0xff]
    %v59 = vld [vmem:[#allocation2 + $0x20] sm:$0xff]
    %v60 = vld [vmem:[#allocation2 + $0x28] sm:$0xff]
    %v61 = vld [vmem:[#allocation2 + $0x30] sm:$0xff]
    %v62 = vld [vmem:[#allocation2 + $0x38] sm:$0xff]
    %v63 = vld [vmem:[#allocation2 + $0x40] sm:$0xff]
    %v64 = vld [vmem:[#allocation2 + $0x48] sm:$0xff]
    %v65 = vld [vmem:[#allocation2 + $0x50] sm:$0xff]
    %v66 = vld [vmem:[#allocation2 + $0x58] sm:$0xff]
    %v67 = vld [vmem:[#allocation2 + $0x60] sm:$0xff]
    %v68 = vld [vmem:[#allocation2 + $0x68] sm:$0xff]
    %v69 = vld [vmem:[#allocation2 + $0x70] sm:$0xff]
    %v70 = vld [vmem:[#allocation2 + $0x78] sm:$0xff]
    %v71 = vpack.c.bf16 %v56, %v55
    %v72 = vpack.c.bf16 %v58, %v57
    %v73 = vpack.c.bf16 %v60, %v59
    %v74 = vpack.c.bf16 %v62, %v61
    %v75 = vpack.c.bf16 %v64, %v63
    %v76 = vpack.c.bf16 %v66, %v65
    %v77 = vpack.c.bf16 %v68, %v67
    %v78 = vpack.c.bf16 %v70, %v69
    %v79 = vld [vmem:[#allocation5] sm:$0xf]
    %v80 = vld [vmem:[#allocation5 + $0x4] sm:$0xf]
    %v81 = vld [vmem:[#allocation5 + $0x8] sm:$0xf]
    %v82 = vld [vmem:[#allocation5 + $0xc] sm:$0xf]
    %v87 = vunpack.c.l.b16 %v79
    %v88 = vunpack.c.l.b16 %v80
    %v89 = vunpack.c.l.b16 %v81
    %v90 = vunpack.c.l.b16 %v82
    %v91 = vpack.c.b16 %v88, %v87
    %v92 = vpack.c.b16 %v90, %v89
    %vm95 = vcmask 261120
    %v97 = vsel %vm95, %v71, 0
    %v100 = vsel %vm95, %v72, 0
    %v103 = vsel %vm95, %v73, 0
    %v106 = vsel %vm95, %v74, 0
    %v109 = vsel %vm95, %v75, 0
    %v112 = vsel %vm95, %v76, 0
    %v115 = vsel %vm95, %v77, 0
    %v118 = vsel %vm95, %v78, 0
    %120 = vmatprep.subr.bf16.mxu0 0
    %121 = vmatpush1.bf16.msra.mxu0 %v91
    %122 = vmatprep.subr.bf16.mxu0 0
    %123 = vmatpush1.bf16.msra.mxu0 %v92
    %124 = vmatprep.subr.bf16.mxu0 0
    %125 = vmatpush1.bf16.msra.mxu0 0
    %126 = vmatprep.subr.bf16.mxu0 0
    %127 = vmatpush1.bf16.msra.mxu0 0
    %128 = vmatprep.subr.bf16.mxu0 0
    %129 = vmatpush1.bf16.msra.mxu0 0
    %130 = vmatprep.subr.bf16.mxu0 0
    %131 = vmatpush1.bf16.msra.mxu0 0
    %132 = vmatprep.subr.bf16.mxu0 0
    %133 = vmatpush1.bf16.msra.mxu0 0
    %134 = vmatprep.subr.bf16.mxu0 0
    %135 = vmatpush1.bf16.msra.mxu0 0
    %136 = vmatprep.subr.bf16.mxu0 0
    %137 = vmatpush1.bf16.msra.mxu0 0
    %138 = vmatprep.subr.bf16.mxu0 0
    %139 = vmatpush1.bf16.msra.mxu0 0
    %140 = vmatprep.subr.bf16.mxu0 0
    %141 = vmatpush1.bf16.msra.mxu0 0
    %142 = vmatprep.subr.bf16.mxu0 0
    %143 = vmatpush1.bf16.msra.mxu0 0
    %144 = vmatprep.subr.bf16.mxu0 0
    %145 = vmatpush1.bf16.msra.mxu0 0
    %146 = vmatprep.subr.bf16.mxu0 0
    %147 = vmatpush1.bf16.msra.mxu0 0
    %148 = vmatprep.subr.bf16.mxu0 0
    %149 = vmatpush1.bf16.msra.mxu0 0
    %150 = vmatprep.subr.bf16.mxu0 0
    %151 = vmatpush1.bf16.msra.mxu0 0
    %152 = vmatprep.mubr.bf16.mxu0 0
    %153 = vmatmul.mubr.bf16.gmra.mrb[0].mxu0 %v97
    %v154 = vpop.f32.mrb[0].mxu0
    %v155 = vadd.f32 0.0, %v154
    %v156 = vpop.f32.mrb[0].mxu0
    %v157 = vpop.f32.mrb[0].mxu0
    %v158 = vadd.f32 0.0, %v157
    %v159 = vpop.f32.mrb[0].mxu0
    %160 = vmatprep.mubr.bf16.mxu0 0
    %161 = vmatmul.mubr.bf16.gmra.mrb[0].mxu0 %v100
    %v162 = vpop.f32.mrb[0].mxu0
    %v163 = vadd.f32 0.0, %v162
    %v164 = vpop.f32.mrb[0].mxu0
    %v165 = vpop.f32.mrb[0].mxu0
    %v166 = vadd.f32 0.0, %v165
    %v167 = vpop.f32.mrb[0].mxu0
    %168 = vmatprep.mubr.bf16.mxu0 0
    %169 = vmatmul.mubr.bf16.gmra.mrb[0].mxu0 %v103
    %v170 = vpop.f32.mrb[0].mxu0
    %v171 = vadd.f32 0.0, %v170
    %v172 = vpop.f32.mrb[0].mxu0
    %v173 = vpop.f32.mrb[0].mxu0
    %v174 = vadd.f32 0.0, %v173
    %v175 = vpop.f32.mrb[0].mxu0
    %176 = vmatprep.mubr.bf16.mxu0 0
    %177 = vmatmul.mubr.bf16.gmra.mrb[0].mxu0 %v106
    %v178 = vpop.f32.mrb[0].mxu0
    %v179 = vadd.f32 0.0, %v178
    %v180 = vpop.f32.mrb[0].mxu0
    %v181 = vpop.f32.mrb[0].mxu0
    %v182 = vadd.f32 0.0, %v181
    %v183 = vpop.f32.mrb[0].mxu0
    %184 = vmatprep.mubr.bf16.mxu0 0
    %185 = vmatmul.mubr.bf16.gmra.mrb[0].mxu0 %v109
    %v186 = vpop.f32.mrb[0].mxu0
    %v187 = vadd.f32 0.0, %v186
    %v188 = vpop.f32.mrb[0].mxu0
    %v189 = vpop.f32.mrb[0].mxu0
    %v190 = vadd.f32 0.0, %v189
    %v191 = vpop.f32.mrb[0].mxu0
    %192 = vmatprep.mubr.bf16.mxu0 0
    %193 = vmatmul.mubr.bf16.gmra.mrb[0].mxu0 %v112
    %v194 = vpop.f32.mrb[0].mxu0
    %v195 = vadd.f32 0.0, %v194
    %v196 = vpop.f32.mrb[0].mxu0
    %v197 = vpop.f32.mrb[0].mxu0
    %v198 = vadd.f32 0.0, %v197
    %v199 = vpop.f32.mrb[0].mxu0
    %200 = vmatprep.mubr.bf16.mxu0 0
    %201 = vmatmul.mubr.bf16.gmra.mrb[0].mxu0 %v115
    %v202 = vpop.f32.mrb[0].mxu0
    %v203 = vadd.f32 0.0, %v202
    %v204 = vpop.f32.mrb[0].mxu0
    %v205 = vpop.f32.mrb[0].mxu0
    %v206 = vadd.f32 0.0, %v205
    %v207 = vpop.f32.mrb[0].mxu0
    %208 = vmatprep.mubr.bf16.mxu0 0
    %209 = vmatmul.mubr.bf16.gmra.mrb[0].mxu0 %v118
    %v210 = vpop.f32.mrb[0].mxu0
    %v211 = vadd.f32 0.0, %v210
    %v212 = vpop.f32.mrb[0].mxu0
    %v213 = vpop.f32.mrb[0].mxu0
    %v214 = vadd.f32 0.0, %v213
    %v215 = vpop.f32.mrb[0].mxu0
    %216 = vdwg.mxu0
    %v217 = vld [vmem:[#allocation7] sm:$0xff]
    %v218 = vadd.f32 %v155, %v217
    %v219 = vadd.f32 %v158, %v217
    %v220 = vadd.f32 %v163, %v217
    %v221 = vadd.f32 %v166, %v217
    %v222 = vadd.f32 %v171, %v217
    %v223 = vadd.f32 %v174, %v217
    %v224 = vadd.f32 %v179, %v217
    %v225 = vadd.f32 %v182, %v217
    %v226 = vadd.f32 %v187, %v217
    %v227 = vadd.f32 %v190, %v217
    %v228 = vadd.f32 %v195, %v217
    %v229 = vadd.f32 %v198, %v217
    %v230 = vadd.f32 %v203, %v217
    %v231 = vadd.f32 %v206, %v217
    %v232 = vadd.f32 %v211, %v217
    %v233 = vadd.f32 %v214, %v217
    %vm234 = vcmask 523264
    %v235 = vsel %vm234, %v218, -inf
    %236 = vmax.xlane.f32.xlu0 %v235
    %v237 = vpop.xlane.xlu0 %236
    %v238 = vsel %vm234, %v219, -inf
    %239 = vmax.xlane.f32.xlu0 %v238
    %v240 = vpop.xlane.xlu0 %239
    %v241 = vsel %vm234, %v220, -inf
    %242 = vmax.xlane.f32.xlu0 %v241
    %v243 = vpop.xlane.xlu0 %242
    %v244 = vsel %vm234, %v221, -inf
    %245 = vmax.xlane.f32.xlu0 %v244
    %v246 = vpop.xlane.xlu0 %245
    %v247 = vsel %vm234, %v222, -inf
    %248 = vmax.xlane.f32.xlu0 %v247
    %v249 = vpop.xlane.xlu0 %248
    %v250 = vsel %vm234, %v223, -inf
    %251 = vmax.xlane.f32.xlu0 %v250
    %v252 = vpop.xlane.xlu0 %251
    %v253 = vsel %vm234, %v224, -inf
    %254 = vmax.xlane.f32.xlu0 %v253
    %v255 = vpop.xlane.xlu0 %254
    %v256 = vsel %vm234, %v225, -inf
    %257 = vmax.xlane.f32.xlu0 %v256
    %v258 = vpop.xlane.xlu0 %257
    %v259 = vsel %vm234, %v226, -inf
    %260 = vmax.xlane.f32.xlu0 %v259
    %v261 = vpop.xlane.xlu0 %260
    %v262 = vsel %vm234, %v227, -inf
    %263 = vmax.xlane.f32.xlu0 %v262
    %v264 = vpop.xlane.xlu0 %263
    %v265 = vsel %vm234, %v228, -inf
    %266 = vmax.xlane.f32.xlu0 %v265
    %v267 = vpop.xlane.xlu0 %266
    %v268 = vsel %vm234, %v229, -inf
    %269 = vmax.xlane.f32.xlu0 %v268
    %v270 = vpop.xlane.xlu0 %269
    %v271 = vsel %vm234, %v230, -inf
    %272 = vmax.xlane.f32.xlu0 %v271
    %v273 = vpop.xlane.xlu0 %272
    %v274 = vsel %vm234, %v231, -inf
    %275 = vmax.xlane.f32.xlu0 %v274
    %v276 = vpop.xlane.xlu0 %275
    %v277 = vsel %vm234, %v232, -inf
    %278 = vmax.xlane.f32.xlu0 %v277
    %v279 = vpop.xlane.xlu0 %278
    %v280 = vsel %vm234, %v233, -inf
    %281 = vmax.xlane.f32.xlu0 %v280
    %v282 = vpop.xlane.xlu0 %281
    %v283 = vsub.f32 %v218, %v237
    %v284 = vsub.f32 %v219, %v240
    %v285 = vsub.f32 %v220, %v243
    %v286 = vsub.f32 %v221, %v246
    %v287 = vsub.f32 %v222, %v249
    %v288 = vsub.f32 %v223, %v252
    %v289 = vsub.f32 %v224, %v255
    %v290 = vsub.f32 %v225, %v258
    %v291 = vsub.f32 %v226, %v261
    %v292 = vsub.f32 %v227, %v264
    %v293 = vsub.f32 %v228, %v267
    %v294 = vsub.f32 %v229, %v270
    %v295 = vsub.f32 %v230, %v273
    %v296 = vsub.f32 %v231, %v276
    %v297 = vsub.f32 %v232, %v279
    %v298 = vsub.f32 %v233, %v282
    %v299 = vmul.f32 %v283, 1.442695
    %v300 = vpow.pop %v299
    %v301 = vmul.f32 %v284, 1.442695
    %v302 = vpow.pop %v301
    %v303 = vmul.f32 %v285, 1.442695
    %v304 = vpow.pop %v303
    %v305 = vmul.f32 %v286, 1.442695
    %v306 = vpow.pop %v305
    %v307 = vmul.f32 %v287, 1.442695
    %v308 = vpow.pop %v307
    %v309 = vmul.f32 %v288, 1.442695
    %v310 = vpow.pop %v309
    %v311 = vmul.f32 %v289, 1.442695
    %v312 = vpow.pop %v311
    %v313 = vmul.f32 %v290, 1.442695
    %v314 = vpow.pop %v313
    %v315 = vmul.f32 %v291, 1.442695
    %v316 = vpow.pop %v315
    %v317 = vmul.f32 %v292, 1.442695
    %v318 = vpow.pop %v317
    %v319 = vmul.f32 %v293, 1.442695
    %v320 = vpow.pop %v319
    %v321 = vmul.f32 %v294, 1.442695
    %v322 = vpow.pop %v321
    %v323 = vmul.f32 %v295, 1.442695
    %v324 = vpow.pop %v323
    %v325 = vmul.f32 %v296, 1.442695
    %v326 = vpow.pop %v325
    %v327 = vmul.f32 %v297, 1.442695
    %v328 = vpow.pop %v327
    %v329 = vmul.f32 %v298, 1.442695
    %v330 = vpow.pop %v329
    %v331 = vsel %vm234, %v300, 0.0
    %332 = vadd.xlane.f32.xlu0 %v331
    %v333 = vpop.xlane.xlu0 %332
    %v334 = vsel %vm234, %v302, 0.0
    %335 = vadd.xlane.f32.xlu0 %v334
    %v336 = vpop.xlane.xlu0 %335
    %v337 = vsel %vm234, %v304, 0.0
    %338 = vadd.xlane.f32.xlu0 %v337
    %v339 = vpop.xlane.xlu0 %338
    %v340 = vsel %vm234, %v306, 0.0
    %341 = vadd.xlane.f32.xlu0 %v340
    %v342 = vpop.xlane.xlu0 %341
    %v343 = vsel %vm234, %v308, 0.0
    %344 = vadd.xlane.f32.xlu0 %v343
    %v345 = vpop.xlane.xlu0 %344
    %v346 = vsel %vm234, %v310, 0.0
    %347 = vadd.xlane.f32.xlu0 %v346
    %v348 = vpop.xlane.xlu0 %347
    %v349 = vsel %vm234, %v312, 0.0
    %350 = vadd.xlane.f32.xlu0 %v349
    %v351 = vpop.xlane.xlu0 %350
    %v352 = vsel %vm234, %v314, 0.0
    %353 = vadd.xlane.f32.xlu0 %v352
    %v354 = vpop.xlane.xlu0 %353
    %v355 = vsel %vm234, %v316, 0.0
    %356 = vadd.xlane.f32.xlu0 %v355
    %v357 = vpop.xlane.xlu0 %356
    %v358 = vsel %vm234, %v318, 0.0
    %359 = vadd.xlane.f32.xlu0 %v358
    %v360 = vpop.xlane.xlu0 %359
    %v361 = vsel %vm234, %v320, 0.0
    %362 = vadd.xlane.f32.xlu0 %v361
    %v363 = vpop.xlane.xlu0 %362
    %v364 = vsel %vm234, %v322, 0.0
    %365 = vadd.xlane.f32.xlu0 %v364
    %v366 = vpop.xlane.xlu0 %365
    %v367 = vsel %vm234, %v324, 0.0
    %368 = vadd.xlane.f32.xlu0 %v367
    %v369 = vpop.xlane.xlu0 %368
    %v370 = vsel %vm234, %v326, 0.0
    %371 = vadd.xlane.f32.xlu0 %v370
    %v372 = vpop.xlane.xlu0 %371
    %v373 = vsel %vm234, %v328, 0.0
    %374 = vadd.xlane.f32.xlu0 %v373
    %v375 = vpop.xlane.xlu0 %374
    %v376 = vsel %vm234, %v330, 0.0
    %377 = vadd.xlane.f32.xlu0 %v376
    %v378 = vpop.xlane.xlu0 %377
    %v379 = vpack.c.bf16 %v55, %v55
    %v380 = vpack.c.bf16 %v56, %v56
    %v381 = vpack.c.bf16 %v57, %v57
    %v382 = vpack.c.bf16 %v58, %v58
    %v383 = vpack.c.bf16 %v59, %v59
    %v384 = vpack.c.bf16 %v60, %v60
    %v385 = vpack.c.bf16 %v61, %v61
    %v386 = vpack.c.bf16 %v62, %v62
    %v387 = vpack.c.bf16 %v63, %v63
    %v388 = vpack.c.bf16 %v64, %v64
    %v389 = vpack.c.bf16 %v65, %v65
    %v390 = vpack.c.bf16 %v66, %v66
    %v391 = vpack.c.bf16 %v67, %v67
    %v392 = vpack.c.bf16 %v68, %v68
    %v393 = vpack.c.bf16 %v69, %v69
    %v394 = vpack.c.bf16 %v70, %v70
    %v395 = vpack.c.bf16 %v300, %v300
    %v396 = vpack.c.bf16 %v302, %v302
    %v397 = vpack.c.bf16 %v304, %v304
    %v398 = vpack.c.bf16 %v306, %v306
    %v399 = vpack.c.bf16 %v308, %v308
    %v400 = vpack.c.bf16 %v310, %v310
    %v401 = vpack.c.bf16 %v312, %v312
    %v402 = vpack.c.bf16 %v314, %v314
    %v403 = vpack.c.bf16 %v316, %v316
    %v404 = vpack.c.bf16 %v318, %v318
    %v405 = vpack.c.bf16 %v320, %v320
    %v406 = vpack.c.bf16 %v322, %v322
    %v407 = vpack.c.bf16 %v324, %v324
    %v408 = vpack.c.bf16 %v326, %v326
    %v409 = vpack.c.bf16 %v328, %v328
    %v410 = vpack.c.bf16 %v330, %v330
    %v412 = vsel %vm234, %v395, 0
    %414 = vmatprep.subr.bf16.mxu0 0
    %415 = vmatpush1.bf16.msra.mxu0 %v379
    %416 = vmatprep.subr.bf16.mxu0 0
    %417 = vmatpush1.bf16.msra.mxu0 %v379
    %418 = vmatprep.subr.bf16.mxu0 0
    %419 = vmatpush1.bf16.msra.mxu0 %v379
    %420 = vmatprep.subr.bf16.mxu0 0
    %421 = vmatpush1.bf16.msra.mxu0 %v379
    %422 = vmatprep.subr.bf16.mxu0 0
    %423 = vmatpush1.bf16.msra.mxu0 0
    %424 = vmatprep.subr.bf16.mxu0 0
    %425 = vmatpush1.bf16.msra.mxu0 0
    %426 = vmatprep.subr.bf16.mxu0 0
    %427 = vmatpush1.bf16.msra.mxu0 0
    %428 = vmatprep.subr.bf16.mxu0 0
    %429 = vmatpush1.bf16.msra.mxu0 0
    %430 = vmatprep.subr.bf16.mxu0 0
    %431 = vmatpush1.bf16.msra.mxu0 0
    %432 = vmatprep.subr.bf16.mxu0 0
    %433 = vmatpush1.bf16.msra.mxu0 0
    %434 = vmatprep.subr.bf16.mxu0 0
    %435 = vmatpush1.bf16.msra.mxu0 0
    %436 = vmatprep.subr.bf16.mxu0 0
    %437 = vmatpush1.bf16.msra.mxu0 0
    %438 = vmatprep.subr.bf16.mxu0 0
    %439 = vmatpush1.bf16.msra.mxu0 0
    %440 = vmatprep.subr.bf16.mxu0 0
    %441 = vmatpush1.bf16.msra.mxu0 0
    %442 = vmatprep.subr.bf16.mxu0 0
    %443 = vmatpush1.bf16.msra.mxu0 0
    %444 = vmatprep.subr.bf16.mxu0 0
    %445 = vmatpush1.bf16.msra.mxu0 0
    %446 = vmatprep.mubr.bf16.mxu0 0
    %447 = vmatmul.mubr.bf16.gmra.mrb[0].mxu0 %v412
    %v448 = vpop.f32.mrb[0].mxu0
    %v449 = vadd.f32 0.0, %v448
    %v450 = vpop.f32.mrb[0].mxu0
    %v451 = vpop.f32.mrb[0].mxu0
    %v452 = vpop.f32.mrb[0].mxu0
    %453 = vdwg.mxu0
    %v455 = vsel %vm234, %v396, 0
    %457 = vmatprep.subr.bf16.mxu0 0
    %458 = vmatpush1.bf16.msra.mxu0 %v380
    %459 = vmatprep.subr.bf16.mxu0 0
    %460 = vmatpush1.bf16.msra.mxu0 %v380
    %461 = vmatprep.subr.bf16.mxu0 0
    %462 = vmatpush1.bf16.msra.mxu0 %v380
    %463 = vmatprep.subr.bf16.mxu0 0
    %464 = vmatpush1.bf16.msra.mxu0 %v380
    %465 = vmatprep.subr.bf16.mxu0 0
    %466 = vmatpush1.bf16.msra.mxu0 0
    %467 = vmatprep.subr.bf16.mxu0 0
    %468 = vmatpush1.bf16.msra.mxu0 0
    %469 = vmatprep.subr.bf16.mxu0 0
    %470 = vmatpush1.bf16.msra.mxu0 0
    %471 = vmatprep.subr.bf16.mxu0 0
    %472 = vmatpush1.bf16.msra.mxu0 0
    %473 = vmatprep.subr.bf16.mxu0 0
    %474 = vmatpush1.bf16.msra.mxu0 0
    %475 = vmatprep.subr.bf16.mxu0 0
    %476 = vmatpush1.bf16.msra.mxu0 0
    %477 = vmatprep.subr.bf16.mxu0 0
    %478 = vmatpush1.bf16.msra.mxu0 0
    %479 = vmatprep.subr.bf16.mxu0 0
    %480 = vmatpush1.bf16.msra.mxu0 0
    %481 = vmatprep.subr.bf16.mxu0 0
    %482 = vmatpush1.bf16.msra.mxu0 0
    %483 = vmatprep.subr.bf16.mxu0 0
    %484 = vmatpush1.bf16.msra.mxu0 0
    %485 = vmatprep.subr.bf16.mxu0 0
    %486 = vmatpush1.bf16.msra.mxu0 0
    %487 = vmatprep.subr.bf16.mxu0 0
    %488 = vmatpush1.bf16.msra.mxu0 0
    %489 = vmatprep.mubr.bf16.mxu0 0
    %490 = vmatmul.mubr.bf16.gmra.mrb[0].mxu0 %v455
    %v491 = vpop.f32.mrb[0].mxu0
    %v492 = vadd.f32 0.0, %v491
    %v493 = vpop.f32.mrb[0].mxu0
    %v494 = vpop.f32.mrb[0].mxu0
    %v495 = vpop.f32.mrb[0].mxu0
    %496 = vdwg.mxu0
    %v498 = vsel %vm234, %v397, 0
    %500 = vmatprep.subr.bf16.mxu0 0
    %501 = vmatpush1.bf16.msra.mxu0 %v381
    %502 = vmatprep.subr.bf16.mxu0 0
    %503 = vmatpush1.bf16.msra.mxu0 %v381
    %504 = vmatprep.subr.bf16.mxu0 0
    %505 = vmatpush1.bf16.msra.mxu0 %v381
    %506 = vmatprep.subr.bf16.mxu0 0
    %507 = vmatpush1.bf16.msra.mxu0 %v381
    %508 = vmatprep.subr.bf16.mxu0 0
    %509 = vmatpush1.bf16.msra.mxu0 0
    %510 = vmatprep.subr.bf16.mxu0 0
    %511 = vmatpush1.bf16.msra.mxu0 0
    %512 = vmatprep.subr.bf16.mxu0 0
    %513 = vmatpush1.bf16.msra.mxu0 0
    %514 = vmatprep.subr.bf16.mxu0 0
    %515 = vmatpush1.bf16.msra.mxu0 0
    %516 = vmatprep.subr.bf16.mxu0 0
    %517 = vmatpush1.bf16.msra.mxu0 0
    %518 = vmatprep.subr.bf16.mxu0 0
    %519 = vmatpush1.bf16.msra.mxu0 0
    %520 = vmatprep.subr.bf16.mxu0 0
    %521 = vmatpush1.bf16.msra.mxu0 0
    %522 = vmatprep.subr.bf16.mxu0 0
    %523 = vmatpush1.bf16.msra.mxu0 0
    %524 = vmatprep.subr.bf16.mxu0 0
    %525 = vmatpush1.bf16.msra.mxu0 0
    %526 = vmatprep.subr.bf16.mxu0 0
    %527 = vmatpush1.bf16.msra.mxu0 0
    %528 = vmatprep.subr.bf16.mxu0 0
    %529 = vmatpush1.bf16.msra.mxu0 0
    %530 = vmatprep.subr.bf16.mxu0 0
    %531 = vmatpush1.bf16.msra.mxu0 0
    %532 = vmatprep.mubr.bf16.mxu0 0
    %533 = vmatmul.mubr.bf16.gmra.mrb[0].mxu0 %v498
    %v534 = vpop.f32.mrb[0].mxu0
    %v535 = vadd.f32 0.0, %v534
    %v536 = vpop.f32.mrb[0].mxu0
    %v537 = vpop.f32.mrb[0].mxu0
    %v538 = vpop.f32.mrb[0].mxu0
    %539 = vdwg.mxu0
    %v541 = vsel %vm234, %v398, 0
    %543 = vmatprep.subr.bf16.mxu0 0
    %544 = vmatpush1.bf16.msra.mxu0 %v382
    %545 = vmatprep.subr.bf16.mxu0 0
    %546 = vmatpush1.bf16.msra.mxu0 %v382
    %547 = vmatprep.subr.bf16.mxu0 0
    %548 = vmatpush1.bf16.msra.mxu0 %v382
    %549 = vmatprep.subr.bf16.mxu0 0
    %550 = vmatpush1.bf16.msra.mxu0 %v382
    %551 = vmatprep.subr.bf16.mxu0 0
    %552 = vmatpush1.bf16.msra.mxu0 0
    %553 = vmatprep.subr.bf16.mxu0 0
    %554 = vmatpush1.bf16.msra.mxu0 0
    %555 = vmatprep.subr.bf16.mxu0 0
    %556 = vmatpush1.bf16.msra.mxu0 0
    %557 = vmatprep.subr.bf16.mxu0 0
    %558 = vmatpush1.bf16.msra.mxu0 0
    %559 = vmatprep.subr.bf16.mxu0 0
    %560 = vmatpush1.bf16.msra.mxu0 0
    %561 = vmatprep.subr.bf16.mxu0 0
    %562 = vmatpush1.bf16.msra.mxu0 0
    %563 = vmatprep.subr.bf16.mxu0 0
    %564 = vmatpush1.bf16.msra.mxu0 0
    %565 = vmatprep.subr.bf16.mxu0 0
    %566 = vmatpush1.bf16.msra.mxu0 0
    %567 = vmatprep.subr.bf16.mxu0 0
    %568 = vmatpush1.bf16.msra.mxu0 0
    %569 = vmatprep.subr.bf16.mxu0 0
    %570 = vmatpush1.bf16.msra.mxu0 0
    %571 = vmatprep.subr.bf16.mxu0 0
    %572 = vmatpush1.bf16.msra.mxu0 0
    %573 = vmatprep.subr.bf16.mxu0 0
    %574 = vmatpush1.bf16.msra.mxu0 0
    %575 = vmatprep.mubr.bf16.mxu0 0
    %576 = vmatmul.mubr.bf16.gmra.mrb[0].mxu0 %v541
    %v577 = vpop.f32.mrb[0].mxu0
    %v578 = vadd.f32 0.0, %v577
    %v579 = vpop.f32.mrb[0].mxu0
    %v580 = vpop.f32.mrb[0].mxu0
    %v581 = vpop.f32.mrb[0].mxu0
    %582 = vdwg.mxu0
    %v584 = vsel %vm234, %v399, 0
    %586 = vmatprep.subr.bf16.mxu0 0
    %587 = vmatpush1.bf16.msra.mxu0 %v383
    %588 = vmatprep.subr.bf16.mxu0 0
    %589 = vmatpush1.bf16.msra.mxu0 %v383
    %590 = vmatprep.subr.bf16.mxu0 0
    %591 = vmatpush1.bf16.msra.mxu0 %v383
    %592 = vmatprep.subr.bf16.mxu0 0
    %593 = vmatpush1.bf16.msra.mxu0 %v383
    %594 = vmatprep.subr.bf16.mxu0 0
    %595 = vmatpush1.bf16.msra.mxu0 0
    %596 = vmatprep.subr.bf16.mxu0 0
    %597 = vmatpush1.bf16.msra.mxu0 0
    %598 = vmatprep.subr.bf16.mxu0 0
    %599 = vmatpush1.bf16.msra.mxu0 0
    %600 = vmatprep.subr.bf16.mxu0 0
    %601 = vmatpush1.bf16.msra.mxu0 0
    %602 = vmatprep.subr.bf16.mxu0 0
    %603 = vmatpush1.bf16.msra.mxu0 0
    %604 = vmatprep.subr.bf16.mxu0 0
    %605 = vmatpush1.bf16.msra.mxu0 0
    %606 = vmatprep.subr.bf16.mxu0 0
    %607 = vmatpush1.bf16.msra.mxu0 0
    %608 = vmatprep.subr.bf16.mxu0 0
    %609 = vmatpush1.bf16.msra.mxu0 0
    %610 = vmatprep.subr.bf16.mxu0 0
    %611 = vmatpush1.bf16.msra.mxu0 0
    %612 = vmatprep.subr.bf16.mxu0 0
    %613 = vmatpush1.bf16.msra.mxu0 0
    %614 = vmatprep.subr.bf16.mxu0 0
    %615 = vmatpush1.bf16.msra.mxu0 0
    %616 = vmatprep.subr.bf16.mxu0 0
    %617 = vmatpush1.bf16.msra.mxu0 0
    %618 = vmatprep.mubr.bf16.mxu0 0
    %619 = vmatmul.mubr.bf16.gmra.mrb[0].mxu0 %v584
    %v620 = vpop.f32.mrb[0].mxu0
    %v621 = vadd.f32 0.0, %v620
    %v622 = vpop.f32.mrb[0].mxu0
    %v623 = vpop.f32.mrb[0].mxu0
    %v624 = vpop.f32.mrb[0].mxu0
    %625 = vdwg.mxu0
    %v627 = vsel %vm234, %v400, 0
    %629 = vmatprep.subr.bf16.mxu0 0
    %630 = vmatpush1.bf16.msra.mxu0 %v384
    %631 = vmatprep.subr.bf16.mxu0 0
    %632 = vmatpush1.bf16.msra.mxu0 %v384
    %633 = vmatprep.subr.bf16.mxu0 0
    %634 = vmatpush1.bf16.msra.mxu0 %v384
    %635 = vmatprep.subr.bf16.mxu0 0
    %636 = vmatpush1.bf16.msra.mxu0 %v384
    %637 = vmatprep.subr.bf16.mxu0 0
    %638 = vmatpush1.bf16.msra.mxu0 0
    %639 = vmatprep.subr.bf16.mxu0 0
    %640 = vmatpush1.bf16.msra.mxu0 0
    %641 = vmatprep.subr.bf16.mxu0 0
    %642 = vmatpush1.bf16.msra.mxu0 0
    %643 = vmatprep.subr.bf16.mxu0 0
    %644 = vmatpush1.bf16.msra.mxu0 0
    %645 = vmatprep.subr.bf16.mxu0 0
    %646 = vmatpush1.bf16.msra.mxu0 0
    %647 = vmatprep.subr.bf16.mxu0 0
    %648 = vmatpush1.bf16.msra.mxu0 0
    %649 = vmatprep.subr.bf16.mxu0 0
    %650 = vmatpush1.bf16.msra.mxu0 0
    %651 = vmatprep.subr.bf16.mxu0 0
    %652 = vmatpush1.bf16.msra.mxu0 0
    %653 = vmatprep.subr.bf16.mxu0 0
    %654 = vmatpush1.bf16.msra.mxu0 0
    %655 = vmatprep.subr.bf16.mxu0 0
    %656 = vmatpush1.bf16.msra.mxu0 0
    %657 = vmatprep.subr.bf16.mxu0 0
    %658 = vmatpush1.bf16.msra.mxu0 0
    %659 = vmatprep.subr.bf16.mxu0 0
    %660 = vmatpush1.bf16.msra.mxu0 0
    %661 = vmatprep.mubr.bf16.mxu0 0
    %662 = vmatmul.mubr.bf16.gmra.mrb[0].mxu0 %v627
    %v663 = vpop.f32.mrb[0].mxu0
    %v664 = vadd.f32 0.0, %v663
    %v665 = vpop.f32.mrb[0].mxu0
    %v666 = vpop.f32.mrb[0].mxu0
    %v667 = vpop.f32.mrb[0].mxu0
    %668 = vdwg.mxu0
    %v670 = vsel %vm234, %v401, 0
    %672 = vmatprep.subr.bf16.mxu0 0
    %673 = vmatpush1.bf16.msra.mxu0 %v385
    %674 = vmatprep.subr.bf16.mxu0 0
    %675 = vmatpush1.bf16.msra.mxu0 %v385
    %676 = vmatprep.subr.bf16.mxu0 0
    %677 = vmatpush1.bf16.msra.mxu0 %v385
    %678 = vmatprep.subr.bf16.mxu0 0
    %679 = vmatpush1.bf16.msra.mxu0 %v385
    %680 = vmatprep.subr.bf16.mxu0 0
    %681 = vmatpush1.bf16.msra.mxu0 0
    %682 = vmatprep.subr.bf16.mxu0 0
    %683 = vmatpush1.bf16.msra.mxu0 0
    %684 = vmatprep.subr.bf16.mxu0 0
    %685 = vmatpush1.bf16.msra.mxu0 0
    %686 = vmatprep.subr.bf16.mxu0 0
    %687 = vmatpush1.bf16.msra.mxu0 0
    %688 = vmatprep.subr.bf16.mxu0 0
    %689 = vmatpush1.bf16.msra.mxu0 0
    %690 = vmatprep.subr.bf16.mxu0 0
    %691 = vmatpush1.bf16.msra.mxu0 0
    %692 = vmatprep.subr.bf16.mxu0 0
    %693 = vmatpush1.bf16.msra.mxu0 0
    %694 = vmatprep.subr.bf16.mxu0 0
    %695 = vmatpush1.bf16.msra.mxu0 0
    %696 = vmatprep.subr.bf16.mxu0 0
    %697 = vmatpush1.bf16.msra.mxu0 0
    %698 = vmatprep.subr.bf16.mxu0 0
    %699 = vmatpush1.bf16.msra.mxu0 0
    %700 = vmatprep.subr.bf16.mxu0 0
    %701 = vmatpush1.bf16.msra.mxu0 0
    %702 = vmatprep.subr.bf16.mxu0 0
    %703 = vmatpush1.bf16.msra.mxu0 0
    %704 = vmatprep.mubr.bf16.mxu0 0
    %705 = vmatmul.mubr.bf16.gmra.mrb[0].mxu0 %v670
    %v706 = vpop.f32.mrb[0].mxu0
    %v707 = vadd.f32 0.0, %v706
    %v708 = vpop.f32.mrb[0].mxu0
    %v709 = vpop.f32.mrb[0].mxu0
    %v710 = vpop.f32.mrb[0].mxu0
    %711 = vdwg.mxu0
    %v713 = vsel %vm234, %v402, 0
    %715 = vmatprep.subr.bf16.mxu0 0
    %716 = vmatpush1.bf16.msra.mxu0 %v386
    %717 = vmatprep.subr.bf16.mxu0 0
    %718 = vmatpush1.bf16.msra.mxu0 %v386
    %719 = vmatprep.subr.bf16.mxu0 0
    %720 = vmatpush1.bf16.msra.mxu0 %v386
    %721 = vmatprep.subr.bf16.mxu0 0
    %722 = vmatpush1.bf16.msra.mxu0 %v386
    %723 = vmatprep.subr.bf16.mxu0 0
    %724 = vmatpush1.bf16.msra.mxu0 0
    %725 = vmatprep.subr.bf16.mxu0 0
    %726 = vmatpush1.bf16.msra.mxu0 0
    %727 = vmatprep.subr.bf16.mxu0 0
    %728 = vmatpush1.bf16.msra.mxu0 0
    %729 = vmatprep.subr.bf16.mxu0 0
    %730 = vmatpush1.bf16.msra.mxu0 0
    %731 = vmatprep.subr.bf16.mxu0 0
    %732 = vmatpush1.bf16.msra.mxu0 0
    %733 = vmatprep.subr.bf16.mxu0 0
    %734 = vmatpush1.bf16.msra.mxu0 0
    %735 = vmatprep.subr.bf16.mxu0 0
    %736 = vmatpush1.bf16.msra.mxu0 0
    %737 = vmatprep.subr.bf16.mxu0 0
    %738 = vmatpush1.bf16.msra.mxu0 0
    %739 = vmatprep.subr.bf16.mxu0 0
    %740 = vmatpush1.bf16.msra.mxu0 0
    %741 = vmatprep.subr.bf16.mxu0 0
    %742 = vmatpush1.bf16.msra.mxu0 0
    %743 = vmatprep.subr.bf16.mxu0 0
    %744 = vmatpush1.bf16.msra.mxu0 0
    %745 = vmatprep.subr.bf16.mxu0 0
    %746 = vmatpush1.bf16.msra.mxu0 0
    %747 = vmatprep.mubr.bf16.mxu0 0
    %748 = vmatmul.mubr.bf16.gmra.mrb[0].mxu0 %v713
    %v749 = vpop.f32.mrb[0].mxu0
    %v750 = vadd.f32 0.0, %v749
    %v751 = vpop.f32.mrb[0].mxu0
    %v752 = vpop.f32.mrb[0].mxu0
    %v753 = vpop.f32.mrb[0].mxu0
    %754 = vdwg.mxu0
    %v756 = vsel %vm234, %v403, 0
    %758 = vmatprep.subr.bf16.mxu0 0
    %759 = vmatpush1.bf16.msra.mxu0 %v387
    %760 = vmatprep.subr.bf16.mxu0 0
    %761 = vmatpush1.bf16.msra.mxu0 %v387
    %762 = vmatprep.subr.bf16.mxu0 0
    %763 = vmatpush1.bf16.msra.mxu0 %v387
    %764 = vmatprep.subr.bf16.mxu0 0
    %765 = vmatpush1.bf16.msra.mxu0 %v387
    %766 = vmatprep.subr.bf16.mxu0 0
    %767 = vmatpush1.bf16.msra.mxu0 0
    %768 = vmatprep.subr.bf16.mxu0 0
    %769 = vmatpush1.bf16.msra.mxu0 0
    %770 = vmatprep.subr.bf16.mxu0 0
    %771 = vmatpush1.bf16.msra.mxu0 0
    %772 = vmatprep.subr.bf16.mxu0 0
    %773 = vmatpush1.bf16.msra.mxu0 0
    %774 = vmatprep.subr.bf16.mxu0 0
    %775 = vmatpush1.bf16.msra.mxu0 0
    %776 = vmatprep.subr.bf16.mxu0 0
    %777 = vmatpush1.bf16.msra.mxu0 0
    %778 = vmatprep.subr.bf16.mxu0 0
    %779 = vmatpush1.bf16.msra.mxu0 0
    %780 = vmatprep.subr.bf16.mxu0 0
    %781 = vmatpush1.bf16.msra.mxu0 0
    %782 = vmatprep.subr.bf16.mxu0 0
    %783 = vmatpush1.bf16.msra.mxu0 0
    %784 = vmatprep.subr.bf16.mxu0 0
    %785 = vmatpush1.bf16.msra.mxu0 0
    %786 = vmatprep.subr.bf16.mxu0 0
    %787 = vmatpush1.bf16.msra.mxu0 0
    %788 = vmatprep.subr.bf16.mxu0 0
    %789 = vmatpush1.bf16.msra.mxu0 0
    %790 = vmatprep.mubr.bf16.mxu0 0
    %791 = vmatmul.mubr.bf16.gmra.mrb[0].mxu0 %v756
    %v792 = vpop.f32.mrb[0].mxu0
    %v793 = vadd.f32 0.0, %v792
    %v794 = vpop.f32.mrb[0].mxu0
    %v795 = vpop.f32.mrb[0].mxu0
    %v796 = vpop.f32.mrb[0].mxu0
    %797 = vdwg.mxu0
    %v799 = vsel %vm234, %v404, 0
    %801 = vmatprep.subr.bf16.mxu0 0
    %802 = vmatpush1.bf16.msra.mxu0 %v388
    %803 = vmatprep.subr.bf16.mxu0 0
    %804 = vmatpush1.bf16.msra.mxu0 %v388
    %805 = vmatprep.subr.bf16.mxu0 0
    %806 = vmatpush1.bf16.msra.mxu0 %v388
    %807 = vmatprep.subr.bf16.mxu0 0
    %808 = vmatpush1.bf16.msra.mxu0 %v388
    %809 = vmatprep.subr.bf16.mxu0 0
    %810 = vmatpush1.bf16.msra.mxu0 0
    %811 = vmatprep.subr.bf16.mxu0 0
    %812 = vmatpush1.bf16.msra.mxu0 0
    %813 = vmatprep.subr.bf16.mxu0 0
    %814 = vmatpush1.bf16.msra.mxu0 0
    %815 = vmatprep.subr.bf16.mxu0 0
    %816 = vmatpush1.bf16.msra.mxu0 0
    %817 = vmatprep.subr.bf16.mxu0 0
    %818 = vmatpush1.bf16.msra.mxu0 0
    %819 = vmatprep.subr.bf16.mxu0 0
    %820 = vmatpush1.bf16.msra.mxu0 0
    %821 = vmatprep.subr.bf16.mxu0 0
    %822 = vmatpush1.bf16.msra.mxu0 0
    %823 = vmatprep.subr.bf16.mxu0 0
    %824 = vmatpush1.bf16.msra.mxu0 0
    %825 = vmatprep.subr.bf16.mxu0 0
    %826 = vmatpush1.bf16.msra.mxu0 0
    %827 = vmatprep.subr.bf16.mxu0 0
    %828 = vmatpush1.bf16.msra.mxu0 0
    %829 = vmatprep.subr.bf16.mxu0 0
    %830 = vmatpush1.bf16.msra.mxu0 0
    %831 = vmatprep.subr.bf16.mxu0 0
    %832 = vmatpush1.bf16.msra.mxu0 0
    %833 = vmatprep.mubr.bf16.mxu0 0
    %834 = vmatmul.mubr.bf16.gmra.mrb[0].mxu0 %v799
    %v835 = vpop.f32.mrb[0].mxu0
    %v836 = vadd.f32 0.0, %v835
    %v837 = vpop.f32.mrb[0].mxu0
    %v838 = vpop.f32.mrb[0].mxu0
    %v839 = vpop.f32.mrb[0].mxu0
    %840 = vdwg.mxu0
    %v842 = vsel %vm234, %v405, 0
    %844 = vmatprep.subr.bf16.mxu0 0
    %845 = vmatpush1.bf16.msra.mxu0 %v389
    %846 = vmatprep.subr.bf16.mxu0 0
    %847 = vmatpush1.bf16.msra.mxu0 %v389
    %848 = vmatprep.subr.bf16.mxu0 0
    %849 = vmatpush1.bf16.msra.mxu0 %v389
    %850 = vmatprep.subr.bf16.mxu0 0
    %851 = vmatpush1.bf16.msra.mxu0 %v389
    %852 = vmatprep.subr.bf16.mxu0 0
    %853 = vmatpush1.bf16.msra.mxu0 0
    %854 = vmatprep.subr.bf16.mxu0 0
    %855 = vmatpush1.bf16.msra.mxu0 0
    %856 = vmatprep.subr.bf16.mxu0 0
    %857 = vmatpush1.bf16.msra.mxu0 0
    %858 = vmatprep.subr.bf16.mxu0 0
    %859 = vmatpush1.bf16.msra.mxu0 0
    %860 = vmatprep.subr.bf16.mxu0 0
    %861 = vmatpush1.bf16.msra.mxu0 0
    %862 = vmatprep.subr.bf16.mxu0 0
    %863 = vmatpush1.bf16.msra.mxu0 0
    %864 = vmatprep.subr.bf16.mxu0 0
    %865 = vmatpush1.bf16.msra.mxu0 0
    %866 = vmatprep.subr.bf16.mxu0 0
    %867 = vmatpush1.bf16.msra.mxu0 0
    %868 = vmatprep.subr.bf16.mxu0 0
    %869 = vmatpush1.bf16.msra.mxu0 0
    %870 = vmatprep.subr.bf16.mxu0 0
    %871 = vmatpush1.bf16.msra.mxu0 0
    %872 = vmatprep.subr.bf16.mxu0 0
    %873 = vmatpush1.bf16.msra.mxu0 0
    %874 = vmatprep.subr.bf16.mxu0 0
    %875 = vmatpush1.bf16.msra.mxu0 0
    %876 = vmatprep.mubr.bf16.mxu0 0
    %877 = vmatmul.mubr.bf16.gmra.mrb[0].mxu0 %v842
    %v878 = vpop.f32.mrb[0].mxu0
    %v879 = vadd.f32 0.0, %v878
    %v880 = vpop.f32.mrb[0].mxu0
    %v881 = vpop.f32.mrb[0].mxu0
    %v882 = vpop.f32.mrb[0].mxu0
    %883 = vdwg.mxu0
    %v885 = vsel %vm234, %v406, 0
    %887 = vmatprep.subr.bf16.mxu0 0
    %888 = vmatpush1.bf16.msra.mxu0 %v390
    %889 = vmatprep.subr.bf16.mxu0 0
    %890 = vmatpush1.bf16.msra.mxu0 %v390
    %891 = vmatprep.subr.bf16.mxu0 0
    %892 = vmatpush1.bf16.msra.mxu0 %v390
    %893 = vmatprep.subr.bf16.mxu0 0
    %894 = vmatpush1.bf16.msra.mxu0 %v390
    %895 = vmatprep.subr.bf16.mxu0 0
    %896 = vmatpush1.bf16.msra.mxu0 0
    %897 = vmatprep.subr.bf16.mxu0 0
    %898 = vmatpush1.bf16.msra.mxu0 0
    %899 = vmatprep.subr.bf16.mxu0 0
    %900 = vmatpush1.bf16.msra.mxu0 0
    %901 = vmatprep.subr.bf16.mxu0 0
    %902 = vmatpush1.bf16.msra.mxu0 0
    %903 = vmatprep.subr.bf16.mxu0 0
    %904 = vmatpush1.bf16.msra.mxu0 0
    %905 = vmatprep.subr.bf16.mxu0 0
    %906 = vmatpush1.bf16.msra.mxu0 0
    %907 = vmatprep.subr.bf16.mxu0 0
    %908 = vmatpush1.bf16.msra.mxu0 0
    %909 = vmatprep.subr.bf16.mxu0 0
    %910 = vmatpush1.bf16.msra.mxu0 0
    %911 = vmatprep.subr.bf16.mxu0 0
    %912 = vmatpush1.bf16.msra.mxu0 0
    %913 = vmatprep.subr.bf16.mxu0 0
    %914 = vmatpush1.bf16.msra.mxu0 0
    %915 = vmatprep.subr.bf16.mxu0 0
    %916 = vmatpush1.bf16.msra.mxu0 0
    %917 = vmatprep.subr.bf16.mxu0 0
    %918 = vmatpush1.bf16.msra.mxu0 0
    %919 = vmatprep.mubr.bf16.mxu0 0
    %920 = vmatmul.mubr.bf16.gmra.mrb[0].mxu0 %v885
    %v921 = vpop.f32.mrb[0].mxu0
    %v922 = vadd.f32 0.0, %v921
    %v923 = vpop.f32.mrb[0].mxu0
    %v924 = vpop.f32.mrb[0].mxu0
    %v925 = vpop.f32.mrb[0].mxu0
    %926 = vdwg.mxu0
    %v928 = vsel %vm234, %v407, 0
    %930 = vmatprep.subr.bf16.mxu0 0
    %931 = vmatpush1.bf16.msra.mxu0 %v391
    %932 = vmatprep.subr.bf16.mxu0 0
    %933 = vmatpush1.bf16.msra.mxu0 %v391
    %934 = vmatprep.subr.bf16.mxu0 0
    %935 = vmatpush1.bf16.msra.mxu0 %v391
    %936 = vmatprep.subr.bf16.mxu0 0
    %937 = vmatpush1.bf16.msra.mxu0 %v391
    %938 = vmatprep.subr.bf16.mxu0 0
    %939 = vmatpush1.bf16.msra.mxu0 0
    %940 = vmatprep.subr.bf16.mxu0 0
    %941 = vmatpush1.bf16.msra.mxu0 0
    %942 = vmatprep.subr.bf16.mxu0 0
    %943 = vmatpush1.bf16.msra.mxu0 0
    %944 = vmatprep.subr.bf16.mxu0 0
    %945 = vmatpush1.bf16.msra.mxu0 0
    %946 = vmatprep.subr.bf16.mxu0 0
    %947 = vmatpush1.bf16.msra.mxu0 0
    %948 = vmatprep.subr.bf16.mxu0 0
    %949 = vmatpush1.bf16.msra.mxu0 0
    %950 = vmatprep.subr.bf16.mxu0 0
    %951 = vmatpush1.bf16.msra.mxu0 0
    %952 = vmatprep.subr.bf16.mxu0 0
    %953 = vmatpush1.bf16.msra.mxu0 0
    %954 = vmatprep.subr.bf16.mxu0 0
    %955 = vmatpush1.bf16.msra.mxu0 0
    %956 = vmatprep.subr.bf16.mxu0 0
    %957 = vmatpush1.bf16.msra.mxu0 0
    %958 = vmatprep.subr.bf16.mxu0 0
    %959 = vmatpush1.bf16.msra.mxu0 0
    %960 = vmatprep.subr.bf16.mxu0 0
    %961 = vmatpush1.bf16.msra.mxu0 0
    %962 = vmatprep.mubr.bf16.mxu0 0
    %963 = vmatmul.mubr.bf16.gmra.mrb[0].mxu0 %v928
    %v964 = vpop.f32.mrb[0].mxu0
    %v965 = vadd.f32 0.0, %v964
    %v966 = vpop.f32.mrb[0].mxu0
    %v967 = vpop.f32.mrb[0].mxu0
    %v968 = vpop.f32.mrb[0].mxu0
    %969 = vdwg.mxu0
    %v971 = vsel %vm234, %v408, 0
    %973 = vmatprep.subr.bf16.mxu0 0
    %974 = vmatpush1.bf16.msra.mxu0 %v392
    %975 = vmatprep.subr.bf16.mxu0 0
    %976 = vmatpush1.bf16.msra.mxu0 %v392
    %977 = vmatprep.subr.bf16.mxu0 0
    %978 = vmatpush1.bf16.msra.mxu0 %v392
    %979 = vmatprep.subr.bf16.mxu0 0
    %980 = vmatpush1.bf16.msra.mxu0 %v392
    %981 = vmatprep.subr.bf16.mxu0 0
    %982 = vmatpush1.bf16.msra.mxu0 0
    %983 = vmatprep.subr.bf16.mxu0 0
    %984 = vmatpush1.bf16.msra.mxu0 0
    %985 = vmatprep.subr.bf16.mxu0 0
    %986 = vmatpush1.bf16.msra.mxu0 0
    %987 = vmatprep.subr.bf16.mxu0 0
    %988 = vmatpush1.bf16.msra.mxu0 0
    %989 = vmatprep.subr.bf16.mxu0 0
    %990 = vmatpush1.bf16.msra.mxu0 0
    %991 = vmatprep.subr.bf16.mxu0 0
    %992 = vmatpush1.bf16.msra.mxu0 0
    %993 = vmatprep.subr.bf16.mxu0 0
    %994 = vmatpush1.bf16.msra.mxu0 0
    %995 = vmatprep.subr.bf16.mxu0 0
    %996 = vmatpush1.bf16.msra.mxu0 0
    %997 = vmatprep.subr.bf16.mxu0 0
    %998 = vmatpush1.bf16.msra.mxu0 0
    %999 = vmatprep.subr.bf16.mxu0 0
    %1000 = vmatpush1.bf16.msra.mxu0 0
    %1001 = vmatprep.subr.bf16.mxu0 0
    %1002 = vmatpush1.bf16.msra.mxu0 0
    %1003 = vmatprep.subr.bf16.mxu0 0
    %1004 = vmatpush1.bf16.msra.mxu0 0
    %1005 = vmatprep.mubr.bf16.mxu0 0
    %1006 = vmatmul.mubr.bf16.gmra.mrb[0].mxu0 %v971
    %v1007 = vpop.f32.mrb[0].mxu0
    %v1008 = vadd.f32 0.0, %v1007
    %v1009 = vpop.f32.mrb[0].mxu0
    %v1010 = vpop.f32.mrb[0].mxu0
    %v1011 = vpop.f32.mrb[0].mxu0
    %1012 = vdwg.mxu0
    %v1014 = vsel %vm234, %v409, 0
    %1016 = vmatprep.subr.bf16.mxu0 0
    %1017 = vmatpush1.bf16.msra.mxu0 %v393
    %1018 = vmatprep.subr.bf16.mxu0 0
    %1019 = vmatpush1.bf16.msra.mxu0 %v393
    %1020 = vmatprep.subr.bf16.mxu0 0
    %1021 = vmatpush1.bf16.msra.mxu0 %v393
    %1022 = vmatprep.subr.bf16.mxu0 0
    %1023 = vmatpush1.bf16.msra.mxu0 %v393
    %1024 = vmatprep.subr.bf16.mxu0 0
    %1025 = vmatpush1.bf16.msra.mxu0 0
    %1026 = vmatprep.subr.bf16.mxu0 0
    %1027 = vmatpush1.bf16.msra.mxu0 0
    %1028 = vmatprep.subr.bf16.mxu0 0
    %1029 = vmatpush1.bf16.msra.mxu0 0
    %1030 = vmatprep.subr.bf16.mxu0 0
    %1031 = vmatpush1.bf16.msra.mxu0 0
    %1032 = vmatprep.subr.bf16.mxu0 0
    %1033 = vmatpush1.bf16.msra.mxu0 0
    %1034 = vmatprep.subr.bf16.mxu0 0
    %1035 = vmatpush1.bf16.msra.mxu0 0
    %1036 = vmatprep.subr.bf16.mxu0 0
    %1037 = vmatpush1.bf16.msra.mxu0 0
    %1038 = vmatprep.subr.bf16.mxu0 0
    %1039 = vmatpush1.bf16.msra.mxu0 0
    %1040 = vmatprep.subr.bf16.mxu0 0
    %1041 = vmatpush1.bf16.msra.mxu0 0
    %1042 = vmatprep.subr.bf16.mxu0 0
    %1043 = vmatpush1.bf16.msra.mxu0 0
    %1044 = vmatprep.subr.bf16.mxu0 0
    %1045 = vmatpush1.bf16.msra.mxu0 0
    %1046 = vmatprep.subr.bf16.mxu0 0
    %1047 = vmatpush1.bf16.msra.mxu0 0
    %1048 = vmatprep.mubr.bf16.mxu0 0
    %1049 = vmatmul.mubr.bf16.gmra.mrb[0].mxu0 %v1014
    %v1050 = vpop.f32.mrb[0].mxu0
    %v1051 = vadd.f32 0.0, %v1050
    %v1052 = vpop.f32.mrb[0].mxu0
    %v1053 = vpop.f32.mrb[0].mxu0
    %v1054 = vpop.f32.mrb[0].mxu0
    %1055 = vdwg.mxu0
    %v1057 = vsel %vm234, %v410, 0
    %1059 = vmatprep.subr.bf16.mxu0 0
    %1060 = vmatpush1.bf16.msra.mxu0 %v394
    %1061 = vmatprep.subr.bf16.mxu0 0
    %1062 = vmatpush1.bf16.msra.mxu0 %v394
    %1063 = vmatprep.subr.bf16.mxu0 0
    %1064 = vmatpush1.bf16.msra.mxu0 %v394
    %1065 = vmatprep.subr.bf16.mxu0 0
    %1066 = vmatpush1.bf16.msra.mxu0 %v394
    %1067 = vmatprep.subr.bf16.mxu0 0
    %1068 = vmatpush1.bf16.msra.mxu0 0
    %1069 = vmatprep.subr.bf16.mxu0 0
    %1070 = vmatpush1.bf16.msra.mxu0 0
    %1071 = vmatprep.subr.bf16.mxu0 0
    %1072 = vmatpush1.bf16.msra.mxu0 0
    %1073 = vmatprep.subr.bf16.mxu0 0
    %1074 = vmatpush1.bf16.msra.mxu0 0
    %1075 = vmatprep.subr.bf16.mxu0 0
    %1076 = vmatpush1.bf16.msra.mxu0 0
    %1077 = vmatprep.subr.bf16.mxu0 0
    %1078 = vmatpush1.bf16.msra.mxu0 0
    %1079 = vmatprep.subr.bf16.mxu0 0
    %1080 = vmatpush1.bf16.msra.mxu0 0
    %1081 = vmatprep.subr.bf16.mxu0 0
    %1082 = vmatpush1.bf16.msra.mxu0 0
    %1083 = vmatprep.subr.bf16.mxu0 0
    %1084 = vmatpush1.bf16.msra.mxu0 0
    %1085 = vmatprep.subr.bf16.mxu0 0
    %1086 = vmatpush1.bf16.msra.mxu0 0
    %1087 = vmatprep.subr.bf16.mxu0 0
    %1088 = vmatpush1.bf16.msra.mxu0 0
    %1089 = vmatprep.subr.bf16.mxu0 0
    %1090 = vmatpush1.bf16.msra.mxu0 0
    %1091 = vmatprep.mubr.bf16.mxu0 0
    %1092 = vmatmul.mubr.bf16.gmra.mrb[0].mxu0 %v1057
    %v1093 = vpop.f32.mrb[0].mxu0
    %v1094 = vadd.f32 0.0, %v1093
    %v1095 = vpop.f32.mrb[0].mxu0
    %v1096 = vpop.f32.mrb[0].mxu0
    %v1097 = vpop.f32.mrb[0].mxu0
    %1098 = vdwg.mxu0
    %v1099 = vrcp.pop %v333
    %v1100 = vrcp.pop %v336
    %v1101 = vrcp.pop %v339
    %v1102 = vrcp.pop %v342
    %v1103 = vrcp.pop %v345
    %v1104 = vrcp.pop %v348
    %v1105 = vrcp.pop %v351
    %v1106 = vrcp.pop %v354
    %v1107 = vrcp.pop %v357
    %v1108 = vrcp.pop %v360
    %v1109 = vrcp.pop %v363
    %v1110 = vrcp.pop %v366
    %v1111 = vrcp.pop %v369
    %v1112 = vrcp.pop %v372
    %v1113 = vrcp.pop %v375
    %v1114 = vrcp.pop %v378
    %v1115 = vmul.f32 %v449, %v1099
    %v1116 = vmul.f32 %v492, %v1100
    %v1117 = vmul.f32 %v535, %v1101
    %v1118 = vmul.f32 %v578, %v1102
    %v1119 = vmul.f32 %v621, %v1103
    %v1120 = vmul.f32 %v664, %v1104
    %v1121 = vmul.f32 %v707, %v1105
    %v1122 = vmul.f32 %v750, %v1106
    %v1123 = vmul.f32 %v793, %v1107
    %v1124 = vmul.f32 %v836, %v1108
    %v1125 = vmul.f32 %v879, %v1109
    %v1126 = vmul.f32 %v922, %v1110
    %v1127 = vmul.f32 %v965, %v1111
    %v1128 = vmul.f32 %v1008, %v1112
    %v1129 = vmul.f32 %v1051, %v1113
    %v1130 = vmul.f32 %v1094, %v1114
    %1131 = vst.msk [vmem:[#allocation8] sm:$0xff] %vm95, %v1115
    %1132 = vst.msk [vmem:[#allocation8 + $0x8] sm:$0xff] %vm95, %v1116
    %1133 = vst.msk [vmem:[#allocation8 + $0x10] sm:$0xff] %vm95, %v1117
    %1134 = vst.msk [vmem:[#allocation8 + $0x18] sm:$0xff] %vm95, %v1118
    %1135 = vst.msk [vmem:[#allocation8 + $0x20] sm:$0xff] %vm95, %v1119
    %1136 = vst.msk [vmem:[#allocation8 + $0x28] sm:$0xff] %vm95, %v1120
    %1137 = vst.msk [vmem:[#allocation8 + $0x30] sm:$0xff] %vm95, %v1121
    %1138 = vst.msk [vmem:[#allocation8 + $0x38] sm:$0xff] %vm95, %v1122
    %1139 = vst.msk [vmem:[#allocation8 + $0x40] sm:$0xff] %vm95, %v1123
    %1140 = vst.msk [vmem:[#allocation8 + $0x48] sm:$0xff] %vm95, %v1124
    %1141 = vst.msk [vmem:[#allocation8 + $0x50] sm:$0xff] %vm95, %v1125
    %1142 = vst.msk [vmem:[#allocation8 + $0x58] sm:$0xff] %vm95, %v1126
    %1143 = vst.msk [vmem:[#allocation8 + $0x60] sm:$0xff] %vm95, %v1127
    %1144 = vst.msk [vmem:[#allocation8 + $0x68] sm:$0xff] %vm95, %v1128
    %1145 = vst.msk [vmem:[#allocation8 + $0x70] sm:$0xff] %vm95, %v1129
    %1146 = vst.msk [vmem:[#allocation8 + $0x78] sm:$0xff] %vm95, %v1130
    // Predicated region
    $region26: #{tpu_custom_call.1} parent=1 // pred_check
      _
    $region27: #{tpu_custom_call.1} parent=1 // pred_check_branch
      %1148 = sbr.rel (0) target = $region29
    $region28: #{tpu_custom_call.1} parent=1 // pred_region
      %s1150 = ssub.s32 2048, 2048
      %1151 = vsyncadd [#allocation4], %s1150
      %s1152 = sshll.u32 [#allocation8], 4
      %s1153 = int_to_ptr.vmem [resolvable:$true] %s1152
      %1158 = dma.vmem_to_hbm [thread:$0]  %s1153, 2048, %s3, [#allocation4], 128, 128, 8
    $region29: #{tpu_custom_call.1} parent=1 // pred_fallthru
      _
    // Predicated region
    $region30: #{tpu_custom_call.1} parent=1 // pred_check
      _
    $region31: #{tpu_custom_call.1} parent=1 // pred_check_branch
      %1160 = sbr.rel (0) target = $region33
    $region32: #{tpu_custom_call.1} parent=1 // pred_region
      %1161 = dma.done [#allocation4], 2048
    $region33: #{tpu_custom_call.1} parent=1 // pred_fallthru
      _
    %1162 = vsyncpa [#allocation3], 1
    %1163 = vsyncpa [#allocation6], 1
    %1164 = vsyncpa [#allocation4], 1

</llo_original>
